<compile_context>
chip_gen: v5e
topology: v5e:2x2
jax: 0.10.0
libtpu: 0.0.40
codegen_flags: <defaults>
</compile_context>

<pallas_src>
import functools

import jax
import jax.numpy as jnp
from jax.experimental import pallas as pl
from jax.experimental.pallas import tpu as pltpu


def _round_up(x, m):
    return (x + m - 1) // m * m


def _cdiv(a, b):
    return -(-a // b)


# ----- exact (erf-based) GELU, matching torch.nn.GELU() default ------------
_SQRT_HALF = 0.7071067811865476


def _erf(x):
    # Abramowitz & Stegun 7.1.26 rational approximation, |err| < 1.5e-7.
    # The divide uses the EUP approximate reciprocal (separate issue slot).
    a1, a2, a3, a4, a5 = (0.254829592, -0.284496736, 1.421413741,
                          -1.453152027, 1.061405429)
    p = 0.3275911
    ax = jnp.abs(x)
    t = pl.reciprocal(1.0 + p * ax, approx=True)
    poly = ((((a5 * t + a4) * t + a3) * t + a2) * t + a1) * t
    e = 1.0 - poly * jnp.exp(-ax * ax)
    return jnp.where(x >= 0, e, -e)


def _gelu_exact(x):
    return 0.5 * x * (1.0 + _erf(x * _SQRT_HALF))


def _aff_kernel(xs_ref, w1_ref, w2_ref, o_ref, *, d):
    # xs: (2, tm, d) f32   [real plane ; imag plane]
    # w1: (2d, 2hh) bf16   packed [[W1r, W1i], [-W1i, W1r]]      (block-diag heads)
    # w2: (2hh, 4d) bf16   packed [[W2r,W2i,W2r,W2i],[-W2i,W2r,-W2i,W2r]]
    # o : (tm, 4d)  f32    [out_r | out_i | filt_r | filt_i]
    xr = xs_ref[0]
    xi = xs_ref[1]
    tm = xr.shape[0]

    # ---- layer 1: ONE bf16 MXU dot (f32 acc), exact GELU on both halves ----
    xcat = jnp.concatenate([xr, xi], axis=-1).astype(jnp.bfloat16)       # (tm, 2d)
    h = jnp.dot(xcat, w1_ref[...], preferred_element_type=jnp.float32)   # (tm, 2hh) = [r1|i1]
    h = _gelu_exact(h)

    # ---- layer 2: ONE bf16 dot -> lane-dense (tm, 4d) = [fr|fi|fr|fi] ------
    g = jnp.dot(h.astype(jnp.bfloat16), w2_ref[...],
                preferred_element_type=jnp.float32)                      # (tm, 4d)

    # ---- out = x * filter, packed output via one XLU roll + two FMAs -------
    #   g      = [fr | fi | fr | fi]
    #   rolled = [fi | fr | fi | fr]
    #   mult1  = [xr | xr |  1 |  1]
    #   mult2  = [-xi| xi |  0 |  0]
    #   o = mult1*g + mult2*rolled = [xr*fr - xi*fi | xr*fi + xi*fr | fr | fi]
    rolled = pltpu.roll(g, shift=d, axis=1)
    ones = jnp.ones((tm, d), jnp.float32)
    zeros = jnp.zeros((tm, d), jnp.float32)
    mult1 = jnp.concatenate([xr, xr, ones, ones], axis=-1)
    mult2 = jnp.concatenate([-xi, xi, zeros, zeros], axis=-1)
    o_ref[...] = mult1 * g + mult2 * rolled


def _block_diag(w):
    """(H, a, b) -> (H*a, H*b) block-diagonal."""
    H, a, b = w.shape
    eye = jnp.eye(H, dtype=w.dtype)
    full = w[:, None, :, :] * eye[:, :, None, None]      # (H, H, a, b)
    return full.transpose(0, 2, 1, 3).reshape(H * a, H * b)


def aff_forward(x, afno_1, afno_2, *, block_rows=2048):
    """Pallas TPU forward of AFF (bias_=False path).

    x:      complex64 (B, F, d)
    afno_1: float32   (2, H, d//H, hidden_out)   [0]=real plane, [1]=imag plane
    afno_2: float32   (2, H, hidden_out, d//H)

    Returns (x * filter_coeff, stop_gradient(filter_coeff), None).
    """
    B, F_, d = x.shape
    two, H, mi, ho = afno_1.shape
    assert two == 2 and H * mi == d, "in_dim must equal head_num * multi_in"
    assert afno_2.shape == (2, H, ho, mi)
    hh = H * ho
    # Lane-dense output guard (keeps the stores unmasked / full 128 lanes).
    assert (4 * d) % 128 == 0, "4*in_dim must be a multiple of 128 (pad in_dim)"

    f32, bf16 = jnp.float32, jnp.bfloat16

    # Block-diagonal per-head weights (see K-inflation note at the top).
    w1r = _block_diag(afno_1[0].astype(f32))
    w1i = _block_diag(afno_1[1].astype(f32))              # (d, hh)
    w2r = _block_diag(afno_2[0].astype(f32))
    w2i = _block_diag(afno_2[1].astype(f32))              # (hh, d)

    # 2x2 real-block complex packing -> one MXU dot per complex layer (bf16).
    w1p = jnp.concatenate(
        [jnp.concatenate([w1r, w1i], axis=1),
         jnp.concatenate([-w1i, w1r], axis=1)], axis=0).astype(bf16)   # (2d, 2hh)
    # Layer-2 weights emit [fr | fi | fr | fi] (full 128-lane MXU result).
    w2p = jnp.concatenate(
        [jnp.concatenate([w2r, w2i, w2r, w2i], axis=1),
         jnp.concatenate([-w2i, w2r, -w2i, w2r], axis=1)], axis=0).astype(bf16)  # (2hh, 4d)

    # One stacked (2, M, d) f32 input: single fused real/imag extraction pass.
    M = B * F_
    xs = jnp.stack([jnp.real(x), jnp.imag(x)], axis=0).astype(f32).reshape(2, M, d)

    # Row tile: as large as the VMEM budget allows (amortizes the ~0.35us
    # per-step overhead), capped so the grid keeps >= 2 "parallel" steps for
    # v7x's two TensorCores.
    vmem_limit = 32 * 1024 * 1024
    fixed_bytes = 2 * 2 * (2 * d * 2 * hh + 2 * hh * 4 * d)  # dbl-buffered bf16 weights
    per_row_bytes = (4 * 8 * (2 * hh)       # concurrent f32 GELU temporaries (headroom x8)
                     + 2 * (2 * hh)         # bf16 copy of the hidden block
                     + 4 * 2 * (2 * d)      # double-buffered input block
                     + 4 * 3 * (4 * d))     # result block + double-buffered output
    tm_budget = max(8, (vmem_limit - fixed_bytes) // per_row_bytes)
    tm = max(8, min(_round_up(block_rows, 8),
                    tm_budget // 8 * 8,
                    _round_up(max(_cdiv(M, 2), 8), 8)))
    Mp = _round_up(M, tm)
    if Mp != M:
        xs = jnp.pad(xs, ((0, 0), (0, Mp - M), (0, 0)))
    grid = (Mp // tm,)

    kernel = functools.partial(_aff_kernel, d=d)

    # Advisory cost estimate (matmul/EUP-dominated fused op).
    flops = (2 * Mp * (2 * d) * (2 * hh)        # layer-1 dot
             + 2 * Mp * (2 * hh) * (4 * d)      # layer-2 dot
             + 40 * Mp * hh + 12 * Mp * d)      # GELU + Hadamard elementwise
    transcendentals = 2 * Mp * 2 * hh           # exp + approx-recip per GELU elem
    bytes_accessed = (4 * 2 * Mp * d            # stacked input planes
                      + 4 * Mp * 4 * d          # packed output
                      + 2 * (2 * d * 2 * hh + 2 * hh * 4 * d))  # bf16 weights

    packed = pl.pallas_call(
        kernel,
        out_shape=jax.ShapeDtypeStruct((Mp, 4 * d), f32),
        grid=grid,
        in_specs=[
            pl.BlockSpec((2, tm, d), lambda m: (0, m, 0)),      # stacked x planes
            # Constant index maps -> fetched once, VMEM resident across rows.
            # (pl.Buffered(1) would drop the redundant 2nd buffer; left at the
            #  default for portability, it is only ~0.4 MiB.)
            pl.BlockSpec((2 * d, 2 * hh), lambda m: (0, 0)),    # packed layer-1 weights
            pl.BlockSpec((2 * hh, 4 * d), lambda m: (0, 0)),    # packed layer-2 weights
        ],
        out_specs=pl.BlockSpec((tm, 4 * d), lambda m: (m, 0)),
        compiler_params=pltpu.CompilerParams(
            dimension_semantics=("parallel",),
            vmem_limit_bytes=vmem_limit,
        ),
        cost_estimate=pl.CostEstimate(
            flops=flops,
            transcendentals=transcendentals,
            bytes_accessed=bytes_accessed,
        ),
    )(xs, w1p, w2p)

    packed = packed[:M].reshape(B, F_, 4 * d)
    out = jax.lax.complex(packed[..., 0:d], packed[..., d:2 * d])
    filt = jax.lax.complex(packed[..., 2 * d:3 * d], packed[..., 3 * d:4 * d])
    return out, jax.lax.stop_gradient(filt), None


if __name__ == "__main__":
    key = jax.random.PRNGKey(0)
    k1, k2, k3, k4 = jax.random.split(key, 4)

    # Small shapes consistent with the module defaults:
    #   in_dim=32, hidden_out=128, head_num=4  ->  multi_in=8
    B, F_, IN_DIM, HIDDEN_OUT, HEADS = 2, 8, 32, 128, 4
    MULTI_IN = IN_DIM // HEADS

    # trunc_normal_(std=0.04, a=-0.2, b=0.2) equivalent.
    afno_1 = 0.04 * jax.random.truncated_normal(
        k1, -5.0, 5.0, (2, HEADS, MULTI_IN, HIDDEN_OUT), jnp.float32)
    afno_2 = 0.04 * jax.random.truncated_normal(
        k2, -5.0, 5.0, (2, HEADS, HIDDEN_OUT, MULTI_IN), jnp.float32)

    x = jax.lax.complex(
        jax.random.normal(k3, (B, F_, IN_DIM), jnp.float32),
        jax.random.normal(k4, (B, F_, IN_DIM), jnp.float32),
    )

    fwd = jax.jit(aff_forward)
    out, filt, none_out = fwd(x, afno_1, afno_2)
    out = jax.block_until_ready(out)
    filt = jax.block_until_ready(filt)

    # -------- pure-JAX reference (exact GELU, high-precision matmuls) -------
    def ref_forward(x, w1, w2):
        B_, Fm, d_ = x.shape
        H_ = w1.shape[1]
        xm = x.reshape(B_, Fm, H_, d_ // H_)

        def cm(a, w):
            return jnp.einsum('bfhi,hio->bfho', a, w,
                              precision=jax.lax.Precision.HIGHEST)

        r1 = jax.nn.gelu(cm(xm.real, w1[0]) - cm(xm.imag, w1[1]),
                         approximate=False)
        i1 = jax.nn.gelu(cm(xm.imag, w1[0]) + cm(xm.real, w1[1]),
                         approximate=False)
        r2 = cm(r1, w2[0]) - cm(i1, w2[1])
        i2 = cm(i1, w2[0]) + cm(r1, w2[1])
        filt_ = jax.lax.complex(r2.reshape(B_, Fm, d_), i2.reshape(B_, Fm, d_))
        return x * filt_, filt_

    ref_out, ref_filt = ref_forward(x, afno_1, afno_2)

    assert none_out is None
    assert out.shape == x.shape and filt.shape == x.shape
    assert jnp.allclose(out, ref_out, atol=5e-3, rtol=5e-3), "output mismatch"
    assert jnp.allclose(filt, ref_filt, atol=5e-3, rtol=5e-3), "filter mismatch"

    print("KERNEL_OK")
</pallas_src>

<mosaic_0001>
module attributes {stable_mosaic.version = 11 : i64} {
  func.func @_aff_kernel(%arg0: i32, %arg1: memref<2x8x32xf32, #tpu.memory_space<vmem>>, %arg2: memref<64x1024xbf16, #tpu.memory_space<vmem>>, %arg3: memref<1024x128xbf16, #tpu.memory_space<vmem>>, %arg4: memref<8x128xf32, #tpu.memory_space<vmem>>) attributes {dimension_semantics = [#tpu.dimension_semantics<parallel>], iteration_bounds = array<i64: 2>, scalar_prefetch = 0 : i64, scratch_operands = 0 : i64, tpu.core_type = #tpu.core_type<tc>, window_params = [{transform_indices = @transform_0, window_bounds = array<i64: 2, 8, 32>}, {pipeline_mode = #tpu.pipeline_mode<synchronous>, transform_indices = @transform_1, window_bounds = array<i64: 64, 1024>}, {pipeline_mode = #tpu.pipeline_mode<synchronous>, transform_indices = @transform_2, window_bounds = array<i64: 1024, 128>}, {transform_indices = @transform_3, window_bounds = array<i64: 8, 128>}]} {
    %c0 = arith.constant 0 : index
    %c0_0 = arith.constant 0 : index
    %c0_1 = arith.constant 0 : index
    %0 = vector.load %arg1[%c0, %c0_0, %c0_1] : memref<2x8x32xf32, #tpu.memory_space<vmem>>, vector<1x8x32xf32>
    %1 = vector.shape_cast %0 : vector<1x8x32xf32> to vector<8x32xf32>
    %c1 = arith.constant 1 : index
    %c0_2 = arith.constant 0 : index
    %c0_3 = arith.constant 0 : index
    %2 = vector.load %arg1[%c1, %c0_2, %c0_3] : memref<2x8x32xf32, #tpu.memory_space<vmem>>, vector<1x8x32xf32>
    %3 = vector.shape_cast %2 : vector<1x8x32xf32> to vector<8x32xf32>
    %4 = tpu.concatenate %1, %3 in 1 : vector<8x32xf32>, vector<8x32xf32> -> vector<8x64xf32>
    %5 = arith.truncf %4 : vector<8x64xf32> to vector<8x64xbf16>
    %c0_4 = arith.constant 0 : index
    %c0_5 = arith.constant 0 : index
    %6 = vector.load %arg2[%c0_4, %c0_5] : memref<64x1024xbf16, #tpu.memory_space<vmem>>, vector<64x1024xbf16>
    %cst = arith.constant dense<0.000000e+00> : vector<8x1024xf32>
    %7 = tpu.matmul %5, %6, %cst {dimension_numbers = #tpu.dot_dimension_numbers<[1], [0], [0], [1], [0, 0, 1, 1], [], []>} : vector<8x64xbf16>, vector<64x1024xbf16>, vector<8x1024xf32> -> vector<8x1024xf32>
    %cst_6 = arith.constant 5.000000e-01 : f32
    %8 = vector.broadcast %cst_6 : f32 to vector<8x1024xf32>
    %9 = arith.mulf %8, %7 : vector<8x1024xf32>
    %cst_7 = arith.constant 0.707106769 : f32
    %10 = vector.broadcast %cst_7 : f32 to vector<8x1024xf32>
    %11 = arith.mulf %7, %10 : vector<8x1024xf32>
    %12 = math.absf %11 : vector<8x1024xf32>
    %cst_8 = arith.constant 0.327591091 : f32
    %13 = vector.broadcast %cst_8 : f32 to vector<8x1024xf32>
    %14 = arith.mulf %13, %12 : vector<8x1024xf32>
    %cst_9 = arith.constant 1.000000e+00 : f32
    %15 = vector.broadcast %cst_9 : f32 to vector<8x1024xf32>
    %16 = arith.addf %15, %14 : vector<8x1024xf32>
    %17 = tpu.reciprocal %16 {approx = true} : vector<8x1024xf32> -> vector<8x1024xf32>
    %cst_10 = arith.constant 1.06140542 : f32
    %18 = vector.broadcast %cst_10 : f32 to vector<8x1024xf32>
    %19 = arith.mulf %18, %17 : vector<8x1024xf32>
    %cst_11 = arith.constant -1.45315206 : f32
    %20 = vector.broadcast %cst_11 : f32 to vector<8x1024xf32>
    %21 = arith.addf %19, %20 : vector<8x1024xf32>
    %22 = arith.mulf %21, %17 : vector<8x1024xf32>
    %cst_12 = arith.constant 1.42141378 : f32
    %23 = vector.broadcast %cst_12 : f32 to vector<8x1024xf32>
    %24 = arith.addf %22, %23 : vector<8x1024xf32>
    %25 = arith.mulf %24, %17 : vector<8x1024xf32>
    %cst_13 = arith.constant -0.284496725 : f32
    %26 = vector.broadcast %cst_13 : f32 to vector<8x1024xf32>
    %27 = arith.addf %25, %26 : vector<8x1024xf32>
    %28 = arith.mulf %27, %17 : vector<8x1024xf32>
    %cst_14 = arith.constant 0.254829586 : f32
    %29 = vector.broadcast %cst_14 : f32 to vector<8x1024xf32>
    %30 = arith.addf %28, %29 : vector<8x1024xf32>
    %31 = arith.mulf %30, %17 : vector<8x1024xf32>
    %cst_15 = arith.constant 0.000000e+00 : f32
    %32 = vector.broadcast %cst_15 : f32 to vector<8x1024xf32>
    %33 = arith.subf %32, %12 : vector<8x1024xf32>
    %34 = arith.mulf %33, %12 : vector<8x1024xf32>
    %35 = math.exp %34 : vector<8x1024xf32>
    %36 = arith.mulf %31, %35 : vector<8x1024xf32>
    %cst_16 = arith.constant 1.000000e+00 : f32
    %37 = vector.broadcast %cst_16 : f32 to vector<8x1024xf32>
    %38 = arith.subf %37, %36 : vector<8x1024xf32>
    %cst_17 = arith.constant 0.000000e+00 : f32
    %39 = vector.broadcast %cst_17 : f32 to vector<8x1024xf32>
    %40 = arith.cmpf oge, %11, %39 : vector<8x1024xf32>
    %cst_18 = arith.constant 0.000000e+00 : f32
    %41 = vector.broadcast %cst_18 : f32 to vector<8x1024xf32>
    %42 = arith.subf %41, %38 : vector<8x1024xf32>
    %43 = arith.select %40, %38, %42 : vector<8x1024xi1>, vector<8x1024xf32>
    %cst_19 = arith.constant 1.000000e+00 : f32
    %44 = vector.broadcast %cst_19 : f32 to vector<8x1024xf32>
    %45 = arith.addf %44, %43 : vector<8x1024xf32>
    %46 = arith.mulf %9, %45 : vector<8x1024xf32>
    %47 = arith.truncf %46 : vector<8x1024xf32> to vector<8x1024xbf16>
    %c0_20 = arith.constant 0 : index
    %c0_21 = arith.constant 0 : index
    %48 = vector.load %arg3[%c0_20, %c0_21] : memref<1024x128xbf16, #tpu.memory_space<vmem>>, vector<1024x128xbf16>
    %cst_22 = arith.constant dense<0.000000e+00> : vector<8x128xf32>
    %49 = tpu.matmul %47, %48, %cst_22 {dimension_numbers = #tpu.dot_dimension_numbers<[1], [0], [0], [1], [0, 0, 1, 1], [], []>} : vector<8x1024xbf16>, vector<1024x128xbf16>, vector<8x128xf32> -> vector<8x128xf32>
    %c32_i32 = arith.constant 32 : i32
    %50 = tpu.dynamic_rotate %49 by %c32_i32 dim 1 : vector<8x128xf32>, i32 -> vector<8x128xf32>
    %cst_23 = arith.constant 1.000000e+00 : f32
    %51 = vector.broadcast %cst_23 : f32 to vector<8x32xf32>
    %cst_24 = arith.constant 0.000000e+00 : f32
    %52 = vector.broadcast %cst_24 : f32 to vector<8x32xf32>
    %53 = tpu.concatenate %1, %1, %51, %51 in 1 : vector<8x32xf32>, vector<8x32xf32>, vector<8x32xf32>, vector<8x32xf32> -> vector<8x128xf32>
    %cst_25 = arith.constant 0.000000e+00 : f32
    %54 = vector.broadcast %cst_25 : f32 to vector<8x32xf32>
    %55 = arith.subf %54, %3 : vector<8x32xf32>
    %56 = tpu.concatenate %55, %3, %52, %52 in 1 : vector<8x32xf32>, vector<8x32xf32>, vector<8x32xf32>, vector<8x32xf32> -> vector<8x128xf32>
    %57 = arith.mulf %53, %49 : vector<8x128xf32>
    %58 = arith.mulf %56, %50 : vector<8x128xf32>
    %59 = arith.addf %57, %58 : vector<8x128xf32>
    %c0_26 = arith.constant 0 : index
    %c0_27 = arith.constant 0 : index
    %60 = vector.load %arg4[%c0_26, %c0_27] : memref<8x128xf32, #tpu.memory_space<vmem>>, vector<8x128xf32>
    tpu.vector_store %arg4[%c0_26, %c0_27], %59 {strides = array<i32>} : memref<8x128xf32, #tpu.memory_space<vmem>>, vector<8x128xf32>,
    return
  }
  func.func @transform_0(%arg0: i32) -> (i32, i32, i32) {
    %c0_i32 = arith.constant 0 : i32
    %c0_i32_0 = arith.constant 0 : i32
    %c0_i32_1 = arith.constant 0 : i32
    return %c0_i32, %arg0, %c0_i32_0 : i32, i32, i32
  }
  func.func @transform_1(%arg0: i32) -> (i32, i32) {
    %c0_i32 = arith.constant 0 : i32
    %c0_i32_0 = arith.constant 0 : i32
    %c0_i32_1 = arith.constant 0 : i32
    return %c0_i32, %c0_i32_0 : i32, i32
  }
  func.func @transform_2(%arg0: i32) -> (i32, i32) {
    %c0_i32 = arith.constant 0 : i32
    %c0_i32_0 = arith.constant 0 : i32
    %c0_i32_1 = arith.constant 0 : i32
    return %c0_i32, %c0_i32_0 : i32, i32
  }
  func.func @transform_3(%arg0: i32) -> (i32, i32) {
    %c0_i32 = arith.constant 0 : i32
    %c0_i32_0 = arith.constant 0 : i32
    return %arg0, %c0_i32 : i32, i32
  }
}

</mosaic_0001>

<llo_original>
// kernel: custom-call
$region0: #{custom-call}
  %s0 = inlined_call_operand.hbm [shape: c64[2,8,32], index: 0, kind: input, shape index: {}]
  %s1 = inlined_call_operand.vmem [shape: f32[2,8,32], index: 1, kind: output, shape index: {}]
  $region1: #{custom-call} parent=0
    #allocation0 [shape = 's32[1]{0}', space=sflag, size = 0x4, scoped, tag = 'scoped memory for custom-call']
    %2 = vsyncpa [#allocation0], 0
    %s4 = sshll.u32 %s0, 4
    %s5 = int_to_ptr.hbm [resolvable:$true] %s4
    %s6 = sshll.u32 %s1, 4
    %s7 = int_to_ptr.vmem [resolvable:$true] %s6
    %9 = dma.hbm_to_vmem [thread:$0]  %s5, 256, %s7, [#allocation0]
    %11 = dma.done [#allocation0], 256
    %12 = vsyncpa [#allocation0], 1

// kernel: custom-call.1
$region0: #{custom-call.1}
  %s0 = inlined_call_operand.hbm [shape: c64[2,8,32], index: 0, kind: input, shape index: {}]
  %s1 = inlined_call_operand.vmem [shape: f32[2,8,32], index: 1, kind: output, shape index: {}]
  %s2 = scalar_lea.hbm %s0, 16
  $region1: #{custom-call.1} parent=0
    #allocation0 [shape = 's32[1]{0}', space=sflag, size = 0x4, scoped, tag = 'scoped memory for custom-call.1']
    %3 = vsyncpa [#allocation0], 0
    %s5 = sshll.u32 %s2, 4
    %s6 = int_to_ptr.hbm [resolvable:$true] %s5
    %s7 = sshll.u32 %s1, 4
    %s8 = int_to_ptr.vmem [resolvable:$true] %s7
    %10 = dma.hbm_to_vmem [thread:$0]  %s6, 256, %s8, [#allocation0]
    %12 = dma.done [#allocation0], 256
    %13 = vsyncpa [#allocation0], 1

// kernel: custom-call.3
$region0: #{custom-call.3}
  %s0 = inlined_call_operand.vmem [shape: f32[2,8,32], index: 0, kind: input, shape index: {}]
  %s1 = inlined_call_operand.vmem [shape: f32[2,8,32], index: 1, kind: input, shape index: {}]
  %s2 = inlined_call_operand.hbm [shape: c64[2,8,32], index: 2, kind: output, shape index: {}]
  %s3 = scalar_lea.hbm %s2, 16
  $region1: #{custom-call.3} parent=0
    #allocation0 [shape = 's32[1]{0}', space=sflag, size = 0x4, scoped, tag = 'scoped memory for custom-call.3']
    %4 = vsyncpa [#allocation0], 0
    %s6 = sshll.u32 %s0, 4
    %s7 = int_to_ptr.vmem [resolvable:$true] %s6
    %s8 = sshll.u32 %s2, 4
    %s9 = int_to_ptr.hbm [resolvable:$true] %s8
    %11 = dma.vmem_to_hbm [thread:$0]  %s7, 256, %s9, [#allocation0]
    %13 = dma.done [#allocation0], 256
    %14 = vsyncpa [#allocation0], 1
  $region2: #{custom-call.3} parent=0
    #allocation1 [shape = 's32[1]{0}', space=sflag, size = 0x4, scoped, tag = 'scoped memory for custom-call.3']
    %15 = vsyncpa [#allocation1], 0
    %s17 = sshll.u32 %s1, 4
    %s18 = int_to_ptr.vmem [resolvable:$true] %s17
    %s19 = sshll.u32 %s3, 4
    %s20 = int_to_ptr.hbm [resolvable:$true] %s19
    %22 = dma.vmem_to_hbm [thread:$0]  %s18, 256, %s20, [#allocation1]
    %24 = dma.done [#allocation1], 256
    %25 = vsyncpa [#allocation1], 1

// kernel: aff_forward.1
$region0: #{aff_forward.1}
  #allocation0 [shape = 'u32[]', space=smem, size = 0x4, offset = 0x4, fixed_abs, tag = 'smem constant byte address 0x4 - core index']
  #allocation1 [shape = 'u32[72,128]{1,0:T(1,128)}', space=vmem, size = 0x9000, scoped, tag = 'internal scratch']
  %s0 = inlined_call_operand.vmem [shape: f32[2,16,32], index: 0, kind: input, shape index: {}]
  %s1 = inlined_call_operand.vmem [shape: bf16[64,1024], index: 1, kind: input, shape index: {}]
  %s2 = inlined_call_operand.vmem [shape: bf16[1024,128], index: 2, kind: input, shape index: {}]
  %s3 = inlined_call_operand.vmem [shape: f32[16,128], index: 3, kind: output, shape index: {}]
  %s4 = sld [smem:[#allocation0]]
  $region83: #{aff_forward.1} parent=0
    _
  %s6 = ssub.s32 1, %s4
  %s7 = scalar_select 0, %s6, %s4
  $region1: #{aff_forward.1} parent=0
    #allocation2 [shape = 'u8[16384]{0}', space=vmem, size = 0x4000, scoped, tag = 'input window, operand 0']
    loop: start=0, step=1, limit=4
    $region2: #{aff_forward.1} parent=1 // loop_pre_header
      _
    $region3: #{aff_forward.1} parent=1 // loop_header
      %s9 = sphi 0, %s13
      %p10 = scmp.ge.s32.totalorder %s9, 4
      %s19 = sphi 0, %s21
      %s22 = sphi 0, %s19
      %s23 = sphi 0, %s22
      %s39 = sphi 0, %s23
      %s43 = sphi 0, %s43
      %s45 = sphi 0, %s43
      %s46 = sphi 0, %s45
      %s60 = sphi 0, %s46
      %s64 = sphi 0, %s64
      %s66 = sphi 0, %s64
      %s67 = sphi 0, %s66
      %s81 = sphi 0, %s67
      %s87 = sphi 0, %s89
      %s90 = sphi 0, %s87
      %s91 = sphi 0, %s90
      %s107 = sphi 0, %s91
    $region4: #{aff_forward.1} parent=1 // loop_header_branch
      %12 = sbr.rel (%p10) target = $region8
    $region5: #{aff_forward.1} parent=1 // loop_body
      %s14 = ssub.s32 %s9, 1
      %s15 = ssub.s32 %s9, 2
      %s16 = sadd.s32 %s9, 1
      %s17 = ssub.s32 %s9, %s16
      %p18 = scmp.eq.s32.totalorder %s17, 0
      %s20 = sadd.s32 %s19, 1
      %s21 = scalar_select %p18, %s19, %s20
      %p24 = pneg %p18
      %p25 = scmp.eq.s32.totalorder %s9, 1
      %p26 = por %p24, %p25
      %p27 = scmp.ne.s32.totalorder %s19, %s22
      %p28 = scmp.eq.s32.totalorder %s9, 0
      %p29 = por %p27, %p28
      %p30 = scmp.ne.s32.totalorder %s19, %s22
      %p31 = scmp.eq.s32.totalorder %s14, 1
      %p32 = por %p30, %p31
      %p33 = scmp.ne.s32.totalorder %s22, %s23
      %p34 = scmp.eq.s32.totalorder %s14, 0
      %p35 = por %p33, %p34
      %p36 = scmp.ne.s32.totalorder %s22, %s23
      %p37 = scmp.eq.s32.totalorder %s15, 1
      %p38 = por %p36, %p37
      %p40 = scmp.ne.s32.totalorder %s23, %s39
      %p41 = scmp.eq.s32.totalorder %s15, 0
      %p42 = por %p40, %p41
      %s44 = sadd.s32 %s43, 1
      %p47 = scmp.eq.s32.totalorder %s9, 1
      %p48 = scmp.ne.s32.totalorder %s43, %s45
      %p49 = scmp.eq.s32.totalorder %s9, 0
      %p50 = por %p48, %p49
      %p51 = scmp.ne.s32.totalorder %s43, %s45
      %p52 = scmp.eq.s32.totalorder %s14, 1
      %p53 = por %p51, %p52
      %p54 = scmp.ne.s32.totalorder %s45, %s46
      %p55 = scmp.eq.s32.totalorder %s14, 0
      %p56 = por %p54, %p55
      %p57 = scmp.ne.s32.totalorder %s45, %s46
      %p58 = scmp.eq.s32.totalorder %s15, 1
      %p59 = por %p57, %p58
      %p61 = scmp.ne.s32.totalorder %s46, %s60
      %p62 = scmp.eq.s32.totalorder %s15, 0
      %p63 = por %p61, %p62
      %s65 = sadd.s32 %s64, 1
      %p68 = scmp.eq.s32.totalorder %s9, 1
      %p69 = scmp.ne.s32.totalorder %s64, %s66
      %p70 = scmp.eq.s32.totalorder %s9, 0
      %p71 = por %p69, %p70
      %p72 = scmp.ne.s32.totalorder %s64, %s66
      %p73 = scmp.eq.s32.totalorder %s14, 1
      %p74 = por %p72, %p73
      %p75 = scmp.ne.s32.totalorder %s66, %s67
      %p76 = scmp.eq.s32.totalorder %s14, 0
      %p77 = por %p75, %p76
      %p78 = scmp.ne.s32.totalorder %s66, %s67
      %p79 = scmp.eq.s32.totalorder %s15, 1
      %p80 = por %p78, %p79
      %p82 = scmp.ne.s32.totalorder %s67, %s81
      %p83 = scmp.eq.s32.totalorder %s15, 0
      %p84 = por %p82, %p83
      %s85 = ssub.s32 %s9, %s16
      %p86 = scmp.eq.s32.totalorder %s85, 0
      %s88 = sadd.s32 %s87, 1
      %s89 = scalar_select %p86, %s87, %s88
      %p92 = pneg %p86
      %p93 = scmp.eq.s32.totalorder %s9, 1
      %p94 = por %p92, %p93
      %p95 = scmp.ne.s32.totalorder %s87, %s90
      %p96 = scmp.eq.s32.totalorder %s9, 0
      %p97 = por %p95, %p96
      %p98 = scmp.ne.s32.totalorder %s87, %s90
      %p99 = scmp.eq.s32.totalorder %s14, 1
      %p100 = por %p98, %p99
      %p101 = scmp.ne.s32.totalorder %s90, %s91
      %p102 = scmp.eq.s32.totalorder %s14, 0
      %p103 = por %p101, %p102
      %p104 = scmp.ne.s32.totalorder %s90, %s91
      %p105 = scmp.eq.s32.totalorder %s15, 1
      %p106 = por %p104, %p105
      %p108 = scmp.ne.s32.totalorder %s91, %s107
      %p109 = scmp.eq.s32.totalorder %s15, 0
      %p110 = por %p108, %p109
      %p111 = scmp.le.s32.totalorder 1, %s9
      %p112 = scmp.lt.s32.totalorder %s9, 3
      %p113 = pnand %p111, %p112
      %p114 = pneg %p113
      // Predicated region
      $region9: #{aff_forward.1} parent=5 // pred_check
        _
      $region10: #{aff_forward.1} parent=5 // pred_check_branch
        %116 = sbr.rel (%p113) target = $region12
      $region11: #{aff_forward.1} parent=5 // pred_region
        %s117 = ssub.s32 %s9, 1
        // Predicated region
        $region13: #{aff_forward.1} parent=11 // pred_check
          %p118 = pneg %p56
        $region14: #{aff_forward.1} parent=11 // pred_check_branch
          %120 = sbr.rel (%p118) target = $region16
        $region15: #{aff_forward.1} parent=11 // pred_region
          _
        $region16: #{aff_forward.1} parent=11 // pred_fallthru
          _
        // Predicated region
        $region17: #{aff_forward.1} parent=11 // pred_check
          %p121 = pneg %p77
        $region18: #{aff_forward.1} parent=11 // pred_check_branch
          %123 = sbr.rel (%p121) target = $region20
        $region19: #{aff_forward.1} parent=11 // pred_region
          _
        $region20: #{aff_forward.1} parent=11 // pred_fallthru
          _
      $region12: #{aff_forward.1} parent=5 // pred_fallthru
        _
      %p124 = scmp.lt.s32.totalorder %s9, 2
      // Predicated region
      $region21: #{aff_forward.1} parent=5 // pred_check
        %p125 = pneg %p124
      $region22: #{aff_forward.1} parent=5 // pred_check_branch
        %127 = sbr.rel (%p125) target = $region24
      $region23: #{aff_forward.1} parent=5 // pred_region
        // Predicated region
        $region25: #{aff_forward.1} parent=23 // pred_check
          %p128 = pneg %p29
        $region26: #{aff_forward.1} parent=23 // pred_check_branch
          %130 = sbr.rel (%p128) target = $region28
        $region27: #{aff_forward.1} parent=23 // pred_region
          %s131 = sand.u32 %s19, 1
          %s132 = sand.u32 %s19, 1
          %s133 = smul.addr %s132, 16
          %s134 = scalar_lea.vmem [#allocation2], %s133
          %s135 = smul.addr %s9, 8
          %s136 = scalar_lea.vmem %s0, %s135
          // Predicated region
          $region29: #{aff_forward.1} parent=27 // pred_check
            _
          $region30: #{aff_forward.1} parent=27 // pred_check_branch
            %138 = sbr.rel (0) target = $region32
          $region31: #{aff_forward.1} parent=27 // pred_region
            // Predicated region
            $region33: #{aff_forward.1} parent=31 // pred_check
              _
            $region34: #{aff_forward.1} parent=31 // pred_check_branch
              %140 = sbr.rel (0) target = $region36
            $region35: #{aff_forward.1} parent=31 // pred_region
              // Predicated region
              $region48: #{aff_forward.1} parent=35 // pred_check
                _
              $region49: #{aff_forward.1} parent=35 // pred_check_branch
                %158 = sbr.rel (0) target = $region51
              $region50: #{aff_forward.1} parent=35 // pred_region
                loop: start=0, step=1, limit=1
                $region52: #{aff_forward.1} parent=50 // loop_pre_header
                  _
                $region53: #{aff_forward.1} parent=50 // loop_header
                  %s160 = sphi 0, %s164
                  %p161 = scmp.ge.s32.totalorder %s160, 1
                  %s165 = sphi %s136, %s136
                  %s166 = sphi %s134, %s134
                $region54: #{aff_forward.1} parent=50 // loop_header_branch
                  %163 = sbr.rel (%p161) target = $region58
                $region55: #{aff_forward.1} parent=50 // loop_body
                  %v167 = vld [vmem:[%s165] sm:$0xff]
                  %168 = vst [vmem:[%s166] sm:$0xff] %v167
                  %v169 = vld [vmem:[%s165 + $0x10] sm:$0xff]
                  %170 = vst [vmem:[%s166 + $0x8] sm:$0xff] %v169
                $region56: #{aff_forward.1} parent=50 // loop_footer
                  %s164 = sadd.s32 1, %s160
                $region57: #{aff_forward.1} parent=50 // loop_footer_branch
                  %159 = sbr.rel target = $region53
                $region58: #{aff_forward.1} parent=50 // loop_exit
                  _
              $region51: #{aff_forward.1} parent=35 // pred_fallthru
                _
              // Predicated region
              $region59: #{aff_forward.1} parent=35 // pred_check
                _
              $region60: #{aff_forward.1} parent=35 // pred_check_branch
                %172 = sbr.rel target = $region62
              $region61: #{aff_forward.1} parent=35 // pred_region
                _
              $region62: #{aff_forward.1} parent=35 // pred_fallthru
                _
            $region36: #{aff_forward.1} parent=31 // pred_fallthru
              _
            // Predicated region
            $region37: #{aff_forward.1} parent=31 // pred_check
              _
            $region38: #{aff_forward.1} parent=31 // pred_check_branch
              %142 = sbr.rel target = $region40
            $region39: #{aff_forward.1} parent=31 // pred_region
              %s144 = ssub.s32 256, 1
              loop: start=0, step=1, limit=1
              $region41: #{aff_forward.1} parent=39 // loop_pre_header
                _
              $region42: #{aff_forward.1} parent=39 // loop_header
                %s146 = sphi 0, %s150
                %p147 = scmp.ge.s32.totalorder %s146, 1
                %s151 = sphi %s136, %s136
                %s152 = sphi %s134, %s134
              $region43: #{aff_forward.1} parent=39 // loop_header_branch
                %149 = sbr.rel (%p147) target = $region47
              $region44: #{aff_forward.1} parent=39 // loop_body
                %v153 = vld [vmem:[%s151] sm:%s144]
                %154 = vst [vmem:[%s152] sm:%s144] %v153
                %v155 = vld [vmem:[%s151 + $0x10] sm:%s144]
                %156 = vst [vmem:[%s152 + $0x8] sm:%s144] %v155
              $region45: #{aff_forward.1} parent=39 // loop_footer
                %s150 = sadd.s32 1, %s146
              $region46: #{aff_forward.1} parent=39 // loop_footer_branch
                %145 = sbr.rel target = $region42
              $region47: #{aff_forward.1} parent=39 // loop_exit
                _
            $region40: #{aff_forward.1} parent=31 // pred_fallthru
              _
          $region32: #{aff_forward.1} parent=27 // pred_fallthru
            _
          %173 = vnop
        $region28: #{aff_forward.1} parent=23 // pred_fallthru
          _
      $region24: #{aff_forward.1} parent=5 // pred_fallthru
        _
      %p174 = scmp.le.s32.totalorder 1, %s9
      %p175 = scmp.lt.s32.totalorder %s9, 3
      %p176 = pnand %p174, %p175
      %p177 = pneg %p176
      // Predicated region
      $region63: #{aff_forward.1} parent=5 // pred_check
        _
      $region64: #{aff_forward.1} parent=5 // pred_check_branch
        %179 = sbr.rel (%p176) target = $region66
      $region65: #{aff_forward.1} parent=5 // pred_region
        %s180 = ssub.s32 %s9, 1
        %s181 = sand.u32 %s22, 1
        %s182 = sand.u32 %s22, 1
        %s183 = smul.addr %s182, 16
        %s184 = scalar_lea.vmem [#allocation2], %s183
        // Predicated region
        $region67: #{aff_forward.1} parent=65 // pred_check
          %p185 = pneg %p35
        $region68: #{aff_forward.1} parent=65 // pred_check_branch
          %187 = sbr.rel (%p185) target = $region70
        $region69: #{aff_forward.1} parent=65 // pred_region
          _
        $region70: #{aff_forward.1} parent=65 // pred_fallthru
          _
        %s188 = sand.u32 %s22, 1
        %s189 = sand.u32 %s22, 1
        %s190 = smul.addr %s189, 16
        %s191 = scalar_lea.vmem [#allocation2], %s190
        %p192 = pneg %p35
        %p193 = pneg %p32
        %p194 = pneg %p56
        %p195 = pneg %p53
        %p196 = pneg %p77
        %p197 = pneg %p74
        %p198 = pneg %p103
        %p199 = pneg %p100
        %p200 = scmp.lt.s32.totalorder %s14, 1
        %s201 = scalar_select %p200, %s14, 1
        %s202 = smul.addr %s201, 8
        %s203 = scalar_lea.vmem %s3, %s202
        %p204 = scmp.lt.s32.totalorder %s14, 1
        %s205 = scalar_select %p204, %s14, 1
        %s206 = smul.addr %s205, 8
        %s207 = scalar_lea.vmem %s3, %s206
        %v209 = vld [vmem:[%s184] sm:$0xff]
        %s210 = scalar_lea.vmem %s184, 8 [#allocation2]
        %v211 = vld [vmem:[%s210] sm:$0xff]
        %213 = vrot.lane.b32.xlu0 %v211, 32
        %v214 = vpop.permute.xlu0 %213
        %vm216 = vcmask 261120
        %v217 = vsel %vm216, %v209, %v214
        %v218 = vpack.c.bf16 %v217, %v217
        %v219 = vld [vmem:[%s1] sm:$0xff]
        %v220 = vld [vmem:[%s1 + $0x8] sm:$0xff]
        %v221 = vld [vmem:[%s1 + $0x10] sm:$0xff]
        %v222 = vld [vmem:[%s1 + $0x18] sm:$0xff]
        %v223 = vld [vmem:[%s1 + $0x20] sm:$0xff]
        %v224 = vld [vmem:[%s1 + $0x28] sm:$0xff]
        %v225 = vld [vmem:[%s1 + $0x30] sm:$0xff]
        %v226 = vld [vmem:[%s1 + $0x38] sm:$0xff]
        %v227 = vld [vmem:[%s1 + $0x40] sm:$0xff]
        %v228 = vld [vmem:[%s1 + $0x48] sm:$0xff]
        %v229 = vld [vmem:[%s1 + $0x50] sm:$0xff]
        %v230 = vld [vmem:[%s1 + $0x58] sm:$0xff]
        %v231 = vld [vmem:[%s1 + $0x60] sm:$0xff]
        %v232 = vld [vmem:[%s1 + $0x68] sm:$0xff]
        %v233 = vld [vmem:[%s1 + $0x70] sm:$0xff]
        %v234 = vld [vmem:[%s1 + $0x78] sm:$0xff]
        %v235 = vld [vmem:[%s1 + $0x80] sm:$0xff]
        %v236 = vld [vmem:[%s1 + $0x88] sm:$0xff]
        %v237 = vld [vmem:[%s1 + $0x90] sm:$0xff]
        %v238 = vld [vmem:[%s1 + $0x98] sm:$0xff]
        %v239 = vld [vmem:[%s1 + $0xa0] sm:$0xff]
        %v240 = vld [vmem:[%s1 + $0xa8] sm:$0xff]
        %v241 = vld [vmem:[%s1 + $0xb0] sm:$0xff]
        %v242 = vld [vmem:[%s1 + $0xb8] sm:$0xff]
        %v243 = vld [vmem:[%s1 + $0xc0] sm:$0xff]
        %v244 = vld [vmem:[%s1 + $0xc8] sm:$0xff]
        %v245 = vld [vmem:[%s1 + $0xd0] sm:$0xff]
        %v246 = vld [vmem:[%s1 + $0xd8] sm:$0xff]
        %v247 = vld [vmem:[%s1 + $0xe0] sm:$0xff]
        %v248 = vld [vmem:[%s1 + $0xe8] sm:$0xff]
        %v249 = vld [vmem:[%s1 + $0xf0] sm:$0xff]
        %v250 = vld [vmem:[%s1 + $0xf8] sm:$0xff]
        %v283 = vunpack.c.l.b16 %v219
        %v284 = vunpack.c.h.b16 %v219
        %v285 = vunpack.c.l.b16 %v220
        %v286 = vunpack.c.h.b16 %v220
        %v287 = vunpack.c.l.b16 %v221
        %v288 = vunpack.c.h.b16 %v221
        %v289 = vunpack.c.l.b16 %v222
        %v290 = vunpack.c.h.b16 %v222
        %v291 = vunpack.c.l.b16 %v223
        %v292 = vunpack.c.h.b16 %v223
        %v293 = vunpack.c.l.b16 %v224
        %v294 = vunpack.c.h.b16 %v224
        %v295 = vunpack.c.l.b16 %v225
        %v296 = vunpack.c.h.b16 %v225
        %v297 = vunpack.c.l.b16 %v226
        %v298 = vunpack.c.h.b16 %v226
        %v299 = vunpack.c.l.b16 %v227
        %v300 = vunpack.c.h.b16 %v227
        %v301 = vunpack.c.l.b16 %v228
        %v302 = vunpack.c.h.b16 %v228
        %v303 = vunpack.c.l.b16 %v229
        %v304 = vunpack.c.h.b16 %v229
        %v305 = vunpack.c.l.b16 %v230
        %v306 = vunpack.c.h.b16 %v230
        %v307 = vunpack.c.l.b16 %v231
        %v308 = vunpack.c.h.b16 %v231
        %v309 = vunpack.c.l.b16 %v232
        %v310 = vunpack.c.h.b16 %v232
        %v311 = vunpack.c.l.b16 %v233
        %v312 = vunpack.c.h.b16 %v233
        %v313 = vunpack.c.l.b16 %v234
        %v314 = vunpack.c.h.b16 %v234
        %v315 = vunpack.c.l.b16 %v235
        %v316 = vunpack.c.h.b16 %v235
        %v317 = vunpack.c.l.b16 %v236
        %v318 = vunpack.c.h.b16 %v236
        %v319 = vunpack.c.l.b16 %v237
        %v320 = vunpack.c.h.b16 %v237
        %v321 = vunpack.c.l.b16 %v238
        %v322 = vunpack.c.h.b16 %v238
        %v323 = vunpack.c.l.b16 %v239
        %v324 = vunpack.c.h.b16 %v239
        %v325 = vunpack.c.l.b16 %v240
        %v326 = vunpack.c.h.b16 %v240
        %v327 = vunpack.c.l.b16 %v241
        %v328 = vunpack.c.h.b16 %v241
        %v329 = vunpack.c.l.b16 %v242
        %v330 = vunpack.c.h.b16 %v242
        %v331 = vunpack.c.l.b16 %v243
        %v332 = vunpack.c.h.b16 %v243
        %v333 = vunpack.c.l.b16 %v244
        %v334 = vunpack.c.h.b16 %v244
        %v335 = vunpack.c.l.b16 %v245
        %v336 = vunpack.c.h.b16 %v245
        %v337 = vunpack.c.l.b16 %v246
        %v338 = vunpack.c.h.b16 %v246
        %v339 = vunpack.c.l.b16 %v247
        %v340 = vunpack.c.h.b16 %v247
        %v341 = vunpack.c.l.b16 %v248
        %v342 = vunpack.c.h.b16 %v248
        %v343 = vunpack.c.l.b16 %v249
        %v344 = vunpack.c.h.b16 %v249
        %v345 = vunpack.c.l.b16 %v250
        %v346 = vunpack.c.h.b16 %v250
        %v347 = vpack.c.b16 %v291, %v283
        %v348 = vpack.c.b16 %v292, %v284
        %v349 = vpack.c.b16 %v293, %v285
        %v350 = vpack.c.b16 %v294, %v286
        %v351 = vpack.c.b16 %v295, %v287
        %v352 = vpack.c.b16 %v296, %v288
        %v353 = vpack.c.b16 %v297, %v289
        %v354 = vpack.c.b16 %v298, %v290
        %v355 = vpack.c.b16 %v307, %v299
        %v356 = vpack.c.b16 %v308, %v300
        %v357 = vpack.c.b16 %v309, %v301
        %v358 = vpack.c.b16 %v310, %v302
        %v359 = vpack.c.b16 %v311, %v303
        %v360 = vpack.c.b16 %v312, %v304
        %v361 = vpack.c.b16 %v313, %v305
        %v362 = vpack.c.b16 %v314, %v306
        %v363 = vpack.c.b16 %v323, %v315
        %v364 = vpack.c.b16 %v324, %v316
        %v365 = vpack.c.b16 %v325, %v317
        %v366 = vpack.c.b16 %v326, %v318
        %v367 = vpack.c.b16 %v327, %v319
        %v368 = vpack.c.b16 %v328, %v320
        %v369 = vpack.c.b16 %v329, %v321
        %v370 = vpack.c.b16 %v330, %v322
        %v371 = vpack.c.b16 %v339, %v331
        %v372 = vpack.c.b16 %v340, %v332
        %v373 = vpack.c.b16 %v341, %v333
        %v374 = vpack.c.b16 %v342, %v334
        %v375 = vpack.c.b16 %v343, %v335
        %v376 = vpack.c.b16 %v344, %v336
        %v377 = vpack.c.b16 %v345, %v337
        %v378 = vpack.c.b16 %v346, %v338
        %vm411 = vcmask 523264
        %v413 = vsel %vm411, %v218, 0
        %415 = vmatpush.bf16.msra.mxu0 0
        %416 = vmatpush.bf16.msra.mxu0 0
        %417 = vmatpush.bf16.msra.mxu0 0
        %418 = vmatpush.bf16.msra.mxu0 0
        %419 = vmatpush.bf16.msra.mxu0 %v371
        %420 = vmatpush.bf16.msra.mxu0 %v363
        %421 = vmatpush.bf16.msra.mxu0 %v355
        %422 = vmatpush.bf16.msra.mxu0 %v347
        %423 = vmatmul.bf16.gmra.mxu0 %v413
        %v424 = vpop.f32.mrf.mxu0
        %v425 = vadd.f32 0.0, %v424
        %v426 = vpop.f32.mrf.mxu0
        %427 = vdwg.mxu0
        %428 = vmatpush.bf16.msra.mxu0 0
        %429 = vmatpush.bf16.msra.mxu0 0
        %430 = vmatpush.bf16.msra.mxu0 0
        %431 = vmatpush.bf16.msra.mxu0 0
        %432 = vmatpush.bf16.msra.mxu0 %v372
        %433 = vmatpush.bf16.msra.mxu0 %v364
        %434 = vmatpush.bf16.msra.mxu0 %v356
        %435 = vmatpush.bf16.msra.mxu0 %v348
        %436 = vmatmul.bf16.gmra.mxu0 %v413
        %v437 = vpop.f32.mrf.mxu0
        %v438 = vadd.f32 0.0, %v437
        %v439 = vpop.f32.mrf.mxu0
        %440 = vdwg.mxu0
        %441 = vmatpush.bf16.msra.mxu0 0
        %442 = vmatpush.bf16.msra.mxu0 0
        %443 = vmatpush.bf16.msra.mxu0 0
        %444 = vmatpush.bf16.msra.mxu0 0
        %445 = vmatpush.bf16.msra.mxu0 %v373
        %446 = vmatpush.bf16.msra.mxu0 %v365
        %447 = vmatpush.bf16.msra.mxu0 %v357
        %448 = vmatpush.bf16.msra.mxu0 %v349
        %449 = vmatmul.bf16.gmra.mxu0 %v413
        %v450 = vpop.f32.mrf.mxu0
        %v451 = vadd.f32 0.0, %v450
        %v452 = vpop.f32.mrf.mxu0
        %453 = vdwg.mxu0
        %454 = vmatpush.bf16.msra.mxu0 0
        %455 = vmatpush.bf16.msra.mxu0 0
        %456 = vmatpush.bf16.msra.mxu0 0
        %457 = vmatpush.bf16.msra.mxu0 0
        %458 = vmatpush.bf16.msra.mxu0 %v374
        %459 = vmatpush.bf16.msra.mxu0 %v366
        %460 = vmatpush.bf16.msra.mxu0 %v358
        %461 = vmatpush.bf16.msra.mxu0 %v350
        %462 = vmatmul.bf16.gmra.mxu0 %v413
        %v463 = vpop.f32.mrf.mxu0
        %v464 = vadd.f32 0.0, %v463
        %v465 = vpop.f32.mrf.mxu0
        %466 = vdwg.mxu0
        %467 = vmatpush.bf16.msra.mxu0 0
        %468 = vmatpush.bf16.msra.mxu0 0
        %469 = vmatpush.bf16.msra.mxu0 0
        %470 = vmatpush.bf16.msra.mxu0 0
        %471 = vmatpush.bf16.msra.mxu0 %v375
        %472 = vmatpush.bf16.msra.mxu0 %v367
        %473 = vmatpush.bf16.msra.mxu0 %v359
        %474 = vmatpush.bf16.msra.mxu0 %v351
        %475 = vmatmul.bf16.gmra.mxu0 %v413
        %v476 = vpop.f32.mrf.mxu0
        %v477 = vadd.f32 0.0, %v476
        %v478 = vpop.f32.mrf.mxu0
        %479 = vdwg.mxu0
        %480 = vmatpush.bf16.msra.mxu0 0
        %481 = vmatpush.bf16.msra.mxu0 0
        %482 = vmatpush.bf16.msra.mxu0 0
        %483 = vmatpush.bf16.msra.mxu0 0
        %484 = vmatpush.bf16.msra.mxu0 %v376
        %485 = vmatpush.bf16.msra.mxu0 %v368
        %486 = vmatpush.bf16.msra.mxu0 %v360
        %487 = vmatpush.bf16.msra.mxu0 %v352
        %488 = vmatmul.bf16.gmra.mxu0 %v413
        %v489 = vpop.f32.mrf.mxu0
        %v490 = vadd.f32 0.0, %v489
        %v491 = vpop.f32.mrf.mxu0
        %492 = vdwg.mxu0
        %493 = vmatpush.bf16.msra.mxu0 0
        %494 = vmatpush.bf16.msra.mxu0 0
        %495 = vmatpush.bf16.msra.mxu0 0
        %496 = vmatpush.bf16.msra.mxu0 0
        %497 = vmatpush.bf16.msra.mxu0 %v377
        %498 = vmatpush.bf16.msra.mxu0 %v369
        %499 = vmatpush.bf16.msra.mxu0 %v361
        %500 = vmatpush.bf16.msra.mxu0 %v353
        %501 = vmatmul.bf16.gmra.mxu0 %v413
        %v502 = vpop.f32.mrf.mxu0
        %v503 = vadd.f32 0.0, %v502
        %v504 = vpop.f32.mrf.mxu0
        %505 = vdwg.mxu0
        %506 = vmatpush.bf16.msra.mxu0 0
        %507 = vmatpush.bf16.msra.mxu0 0
        %508 = vmatpush.bf16.msra.mxu0 0
        %509 = vmatpush.bf16.msra.mxu0 0
        %510 = vmatpush.bf16.msra.mxu0 %v378
        %511 = vmatpush.bf16.msra.mxu0 %v370
        %512 = vmatpush.bf16.msra.mxu0 %v362
        %513 = vmatpush.bf16.msra.mxu0 %v354
        %514 = vmatmul.bf16.gmra.mxu0 %v413
        %v515 = vpop.f32.mrf.mxu0
        %v516 = vadd.f32 0.0, %v515
        %v517 = vpop.f32.mrf.mxu0
        %518 = vdwg.mxu0
        %v519 = vmul.f32 %v425, 0.5
        %v520 = vmul.f32 %v438, 0.5
        %v521 = vmul.f32 %v451, 0.5
        %v522 = vmul.f32 %v464, 0.5
        %v523 = vmul.f32 %v477, 0.5
        %v524 = vmul.f32 %v490, 0.5
        %v525 = vmul.f32 %v503, 0.5
        %v526 = vmul.f32 %v516, 0.5
        %v527 = vmul.f32 %v425, 0.70710677
        %v528 = vmul.f32 %v438, 0.70710677
        %v529 = vmul.f32 %v451, 0.70710677
        %v530 = vmul.f32 %v464, 0.70710677
        %v531 = vmul.f32 %v477, 0.70710677
        %v532 = vmul.f32 %v490, 0.70710677
        %v533 = vmul.f32 %v503, 0.70710677
        %v534 = vmul.f32 %v516, 0.70710677
        %v535 = vand.u32 2147483647, %v527
        %v536 = vand.u32 2147483647, %v528
        %v537 = vand.u32 2147483647, %v529
        %v538 = vand.u32 2147483647, %v530
        %v539 = vand.u32 2147483647, %v531
        %v540 = vand.u32 2147483647, %v532
        %v541 = vand.u32 2147483647, %v533
        %v542 = vand.u32 2147483647, %v534
        %v543 = vmul.f32 %v535, 0.3275911
        %v544 = vmul.f32 %v536, 0.3275911
        %v545 = vmul.f32 %v537, 0.3275911
        %v546 = vmul.f32 %v538, 0.3275911
        %v547 = vmul.f32 %v539, 0.3275911
        %v548 = vmul.f32 %v540, 0.3275911
        %v549 = vmul.f32 %v541, 0.3275911
        %v550 = vmul.f32 %v542, 0.3275911
        %v551 = vadd.f32 %v543, 1.0
        %v552 = vadd.f32 %v544, 1.0
        %v553 = vadd.f32 %v545, 1.0
        %v554 = vadd.f32 %v546, 1.0
        %v555 = vadd.f32 %v547, 1.0
        %v556 = vadd.f32 %v548, 1.0
        %v557 = vadd.f32 %v549, 1.0
        %v558 = vadd.f32 %v550, 1.0
        %v559 = vrcp.pop %v551
        %v560 = vrcp.pop %v552
        %v561 = vrcp.pop %v553
        %v562 = vrcp.pop %v554
        %v563 = vrcp.pop %v555
        %v564 = vrcp.pop %v556
        %v565 = vrcp.pop %v557
        %v566 = vrcp.pop %v558
        %v567 = vmul.f32 %v559, 1.0614054
        %v568 = vmul.f32 %v560, 1.0614054
        %v569 = vmul.f32 %v561, 1.0614054
        %v570 = vmul.f32 %v562, 1.0614054
        %v571 = vmul.f32 %v563, 1.0614054
        %v572 = vmul.f32 %v564, 1.0614054
        %v573 = vmul.f32 %v565, 1.0614054
        %v574 = vmul.f32 %v566, 1.0614054
        %v575 = vadd.f32 %v567, -1.4531521
        %v576 = vadd.f32 %v568, -1.4531521
        %v577 = vadd.f32 %v569, -1.4531521
        %v578 = vadd.f32 %v570, -1.4531521
        %v579 = vadd.f32 %v571, -1.4531521
        %v580 = vadd.f32 %v572, -1.4531521
        %v581 = vadd.f32 %v573, -1.4531521
        %v582 = vadd.f32 %v574, -1.4531521
        %v583 = vmul.f32 %v575, %v559
        %v584 = vmul.f32 %v576, %v560
        %v585 = vmul.f32 %v577, %v561
        %v586 = vmul.f32 %v578, %v562
        %v587 = vmul.f32 %v579, %v563
        %v588 = vmul.f32 %v580, %v564
        %v589 = vmul.f32 %v581, %v565
        %v590 = vmul.f32 %v582, %v566
        %v591 = vadd.f32 %v583, 1.4214138
        %v592 = vadd.f32 %v584, 1.4214138
        %v593 = vadd.f32 %v585, 1.4214138
        %v594 = vadd.f32 %v586, 1.4214138
        %v595 = vadd.f32 %v587, 1.4214138
        %v596 = vadd.f32 %v588, 1.4214138
        %v597 = vadd.f32 %v589, 1.4214138
        %v598 = vadd.f32 %v590, 1.4214138
        %v599 = vmul.f32 %v591, %v559
        %v600 = vmul.f32 %v592, %v560
        %v601 = vmul.f32 %v593, %v561
        %v602 = vmul.f32 %v594, %v562
        %v603 = vmul.f32 %v595, %v563
        %v604 = vmul.f32 %v596, %v564
        %v605 = vmul.f32 %v597, %v565
        %v606 = vmul.f32 %v598, %v566
        %v607 = vadd.f32 %v599, -0.28449672
        %v608 = vadd.f32 %v600, -0.28449672
        %v609 = vadd.f32 %v601, -0.28449672
        %v610 = vadd.f32 %v602, -0.28449672
        %v611 = vadd.f32 %v603, -0.28449672
        %v612 = vadd.f32 %v604, -0.28449672
        %v613 = vadd.f32 %v605, -0.28449672
        %v614 = vadd.f32 %v606, -0.28449672
        %v615 = vmul.f32 %v607, %v559
        %v616 = vmul.f32 %v608, %v560
        %v617 = vmul.f32 %v609, %v561
        %v618 = vmul.f32 %v610, %v562
        %v619 = vmul.f32 %v611, %v563
        %v620 = vmul.f32 %v612, %v564
        %v621 = vmul.f32 %v613, %v565
        %v622 = vmul.f32 %v614, %v566
        %v623 = vadd.f32 %v615, 0.2548296
        %v624 = vadd.f32 %v616, 0.2548296
        %v625 = vadd.f32 %v617, 0.2548296
        %v626 = vadd.f32 %v618, 0.2548296
        %v627 = vadd.f32 %v619, 0.2548296
        %v628 = vadd.f32 %v620, 0.2548296
        %v629 = vadd.f32 %v621, 0.2548296
        %v630 = vadd.f32 %v622, 0.2548296
        %v631 = vmul.f32 %v623, %v559
        %v632 = vmul.f32 %v624, %v560
        %v633 = vmul.f32 %v625, %v561
        %v634 = vmul.f32 %v626, %v562
        %v635 = vmul.f32 %v627, %v563
        %v636 = vmul.f32 %v628, %v564
        %v637 = vmul.f32 %v629, %v565
        %v638 = vmul.f32 %v630, %v566
        %v639 = vsub.f32 0.0, %v535
        %v640 = vsub.f32 0.0, %v536
        %v641 = vsub.f32 0.0, %v537
        %v642 = vsub.f32 0.0, %v538
        %v643 = vsub.f32 0.0, %v539
        %v644 = vsub.f32 0.0, %v540
        %v645 = vsub.f32 0.0, %v541
        %v646 = vsub.f32 0.0, %v542
        %v647 = vmul.f32 %v639, %v535
        %v648 = vmul.f32 %v640, %v536
        %v649 = vmul.f32 %v641, %v537
        %v650 = vmul.f32 %v642, %v538
        %v651 = vmul.f32 %v643, %v539
        %v652 = vmul.f32 %v644, %v540
        %v653 = vmul.f32 %v645, %v541
        %v654 = vmul.f32 %v646, %v542
        %v655 = vmul.f32 %v647, 1.442695
        %v656 = vpow.pop %v655
        %v657 = vmul.f32 %v648, 1.442695
        %v658 = vpow.pop %v657
        %v659 = vmul.f32 %v649, 1.442695
        %v660 = vpow.pop %v659
        %v661 = vmul.f32 %v650, 1.442695
        %v662 = vpow.pop %v661
        %v663 = vmul.f32 %v651, 1.442695
        %v664 = vpow.pop %v663
        %v665 = vmul.f32 %v652, 1.442695
        %v666 = vpow.pop %v665
        %v667 = vmul.f32 %v653, 1.442695
        %v668 = vpow.pop %v667
        %v669 = vmul.f32 %v654, 1.442695
        %v670 = vpow.pop %v669
        %v671 = vmul.f32 %v631, %v656
        %v672 = vmul.f32 %v632, %v658
        %v673 = vmul.f32 %v633, %v660
        %v674 = vmul.f32 %v634, %v662
        %v675 = vmul.f32 %v635, %v664
        %v676 = vmul.f32 %v636, %v666
        %v677 = vmul.f32 %v637, %v668
        %v678 = vmul.f32 %v638, %v670
        %v679 = vsub.f32 1.0, %v671
        %v680 = vsub.f32 1.0, %v672
        %v681 = vsub.f32 1.0, %v673
        %v682 = vsub.f32 1.0, %v674
        %v683 = vsub.f32 1.0, %v675
        %v684 = vsub.f32 1.0, %v676
        %v685 = vsub.f32 1.0, %v677
        %v686 = vsub.f32 1.0, %v678
        %vm687 = vcmp.ge.f32.partialorder %v527, 0.0
        %vm688 = vcmp.ge.f32.partialorder %v528, 0.0
        %vm689 = vcmp.ge.f32.partialorder %v529, 0.0
        %vm690 = vcmp.ge.f32.partialorder %v530, 0.0
        %vm691 = vcmp.ge.f32.partialorder %v531, 0.0
        %vm692 = vcmp.ge.f32.partialorder %v532, 0.0
        %vm693 = vcmp.ge.f32.partialorder %v533, 0.0
        %vm694 = vcmp.ge.f32.partialorder %v534, 0.0
        %v695 = vsub.f32 0.0, %v679
        %v696 = vsub.f32 0.0, %v680
        %v697 = vsub.f32 0.0, %v681
        %v698 = vsub.f32 0.0, %v682
        %v699 = vsub.f32 0.0, %v683
        %v700 = vsub.f32 0.0, %v684
        %v701 = vsub.f32 0.0, %v685
        %v702 = vsub.f32 0.0, %v686
        %v703 = vsel %vm687, %v679, %v695
        %v704 = vsel %vm688, %v680, %v696
        %v705 = vsel %vm689, %v681, %v697
        %v706 = vsel %vm690, %v682, %v698
        %v707 = vsel %vm691, %v683, %v699
        %v708 = vsel %vm692, %v684, %v700
        %v709 = vsel %vm693, %v685, %v701
        %v710 = vsel %vm694, %v686, %v702
        %v711 = vadd.f32 %v703, 1.0
        %v712 = vadd.f32 %v704, 1.0
        %v713 = vadd.f32 %v705, 1.0
        %v714 = vadd.f32 %v706, 1.0
        %v715 = vadd.f32 %v707, 1.0
        %v716 = vadd.f32 %v708, 1.0
        %v717 = vadd.f32 %v709, 1.0
        %v718 = vadd.f32 %v710, 1.0
        %v719 = vmul.f32 %v519, %v711
        %v720 = vmul.f32 %v520, %v712
        %v721 = vmul.f32 %v521, %v713
        %v722 = vmul.f32 %v522, %v714
        %v723 = vmul.f32 %v523, %v715
        %v724 = vmul.f32 %v524, %v716
        %v725 = vmul.f32 %v525, %v717
        %v726 = vmul.f32 %v526, %v718
        %v727 = vpack.c.bf16 %v719, %v719
        %v728 = vpack.c.bf16 %v720, %v720
        %v729 = vpack.c.bf16 %v721, %v721
        %v730 = vpack.c.bf16 %v722, %v722
        %v731 = vpack.c.bf16 %v723, %v723
        %v732 = vpack.c.bf16 %v724, %v724
        %v733 = vpack.c.bf16 %v725, %v725
        %v734 = vpack.c.bf16 %v726, %v726
        %v735 = vld [vmem:[%s2] sm:$0xf]
        %v736 = vld [vmem:[%s2 + $0x4] sm:$0xf]
        %v737 = vld [vmem:[%s2 + $0x8] sm:$0xf]
        %v738 = vld [vmem:[%s2 + $0xc] sm:$0xf]
        %v739 = vld [vmem:[%s2 + $0x10] sm:$0xf]
        %v740 = vld [vmem:[%s2 + $0x14] sm:$0xf]
        %v741 = vld [vmem:[%s2 + $0x18] sm:$0xf]
        %v742 = vld [vmem:[%s2 + $0x1c] sm:$0xf]
        %v743 = vld [vmem:[%s2 + $0x20] sm:$0xf]
        %v744 = vld [vmem:[%s2 + $0x24] sm:$0xf]
        %v745 = vld [vmem:[%s2 + $0x28] sm:$0xf]
        %v746 = vld [vmem:[%s2 + $0x2c] sm:$0xf]
        %v747 = vld [vmem:[%s2 + $0x30] sm:$0xf]
        %v748 = vld [vmem:[%s2 + $0x34] sm:$0xf]
        %v749 = vld [vmem:[%s2 + $0x38] sm:$0xf]
        %v750 = vld [vmem:[%s2 + $0x3c] sm:$0xf]
        %v751 = vld [vmem:[%s2 + $0x40] sm:$0xf]
        %v752 = vld [vmem:[%s2 + $0x44] sm:$0xf]
        %v753 = vld [vmem:[%s2 + $0x48] sm:$0xf]
        %v754 = vld [vmem:[%s2 + $0x4c] sm:$0xf]
        %v755 = vld [vmem:[%s2 + $0x50] sm:$0xf]
        %v756 = vld [vmem:[%s2 + $0x54] sm:$0xf]
        %v757 = vld [vmem:[%s2 + $0x58] sm:$0xf]
        %v758 = vld [vmem:[%s2 + $0x5c] sm:$0xf]
        %v759 = vld [vmem:[%s2 + $0x60] sm:$0xf]
        %v760 = vld [vmem:[%s2 + $0x64] sm:$0xf]
        %v761 = vld [vmem:[%s2 + $0x68] sm:$0xf]
        %v762 = vld [vmem:[%s2 + $0x6c] sm:$0xf]
        %v763 = vld [vmem:[%s2 + $0x70] sm:$0xf]
        %v764 = vld [vmem:[%s2 + $0x74] sm:$0xf]
        %v765 = vld [vmem:[%s2 + $0x78] sm:$0xf]
        %v766 = vld [vmem:[%s2 + $0x7c] sm:$0xf]
        %v767 = vld [vmem:[%s2 + $0x80] sm:$0xf]
        %v768 = vld [vmem:[%s2 + $0x84] sm:$0xf]
        %v769 = vld [vmem:[%s2 + $0x88] sm:$0xf]
        %v770 = vld [vmem:[%s2 + $0x8c] sm:$0xf]
        %v771 = vld [vmem:[%s2 + $0x90] sm:$0xf]
        %v772 = vld [vmem:[%s2 + $0x94] sm:$0xf]
        %v773 = vld [vmem:[%s2 + $0x98] sm:$0xf]
        %v774 = vld [vmem:[%s2 + $0x9c] sm:$0xf]
        %v775 = vld [vmem:[%s2 + $0xa0] sm:$0xf]
        %v776 = vld [vmem:[%s2 + $0xa4] sm:$0xf]
        %v777 = vld [vmem:[%s2 + $0xa8] sm:$0xf]
        %v778 = vld [vmem:[%s2 + $0xac] sm:$0xf]
        %v779 = vld [vmem:[%s2 + $0xb0] sm:$0xf]
        %v780 = vld [vmem:[%s2 + $0xb4] sm:$0xf]
        %v781 = vld [vmem:[%s2 + $0xb8] sm:$0xf]
        %v782 = vld [vmem:[%s2 + $0xbc] sm:$0xf]
        %v783 = vld [vmem:[%s2 + $0xc0] sm:$0xf]
        %v784 = vld [vmem:[%s2 + $0xc4] sm:$0xf]
        %v785 = vld [vmem:[%s2 + $0xc8] sm:$0xf]
        %v786 = vld [vmem:[%s2 + $0xcc] sm:$0xf]
        %v787 = vld [vmem:[%s2 + $0xd0] sm:$0xf]
        %v788 = vld [vmem:[%s2 + $0xd4] sm:$0xf]
        %v789 = vld [vmem:[%s2 + $0xd8] sm:$0xf]
        %v790 = vld [vmem:[%s2 + $0xdc] sm:$0xf]
        %v791 = vld [vmem:[%s2 + $0xe0] sm:$0xf]
        %v792 = vld [vmem:[%s2 + $0xe4] sm:$0xf]
        %v793 = vld [vmem:[%s2 + $0xe8] sm:$0xf]
        %v794 = vld [vmem:[%s2 + $0xec] sm:$0xf]
        %v795 = vld [vmem:[%s2 + $0xf0] sm:$0xf]
        %v796 = vld [vmem:[%s2 + $0xf4] sm:$0xf]
        %v797 = vld [vmem:[%s2 + $0xf8] sm:$0xf]
        %v798 = vld [vmem:[%s2 + $0xfc] sm:$0xf]
        %v799 = vld [vmem:[%s2 + $0x100] sm:$0xf]
        %v800 = vld [vmem:[%s2 + $0x104] sm:$0xf]
        %v801 = vld [vmem:[%s2 + $0x108] sm:$0xf]
        %v802 = vld [vmem:[%s2 + $0x10c] sm:$0xf]
        %v803 = vld [vmem:[%s2 + $0x110] sm:$0xf]
        %v804 = vld [vmem:[%s2 + $0x114] sm:$0xf]
        %v805 = vld [vmem:[%s2 + $0x118] sm:$0xf]
        %v806 = vld [vmem:[%s2 + $0x11c] sm:$0xf]
        %v807 = vld [vmem:[%s2 + $0x120] sm:$0xf]
        %v808 = vld [vmem:[%s2 + $0x124] sm:$0xf]
        %v809 = vld [vmem:[%s2 + $0x128] sm:$0xf]
        %v810 = vld [vmem:[%s2 + $0x12c] sm:$0xf]
        %v811 = vld [vmem:[%s2 + $0x130] sm:$0xf]
        %v812 = vld [vmem:[%s2 + $0x134] sm:$0xf]
        %v813 = vld [vmem:[%s2 + $0x138] sm:$0xf]
        %v814 = vld [vmem:[%s2 + $0x13c] sm:$0xf]
        %v815 = vld [vmem:[%s2 + $0x140] sm:$0xf]
        %v816 = vld [vmem:[%s2 + $0x144] sm:$0xf]
        %v817 = vld [vmem:[%s2 + $0x148] sm:$0xf]
        %v818 = vld [vmem:[%s2 + $0x14c] sm:$0xf]
        %v819 = vld [vmem:[%s2 + $0x150] sm:$0xf]
        %v820 = vld [vmem:[%s2 + $0x154] sm:$0xf]
        %v821 = vld [vmem:[%s2 + $0x158] sm:$0xf]
        %v822 = vld [vmem:[%s2 + $0x15c] sm:$0xf]
        %v823 = vld [vmem:[%s2 + $0x160] sm:$0xf]
        %v824 = vld [vmem:[%s2 + $0x164] sm:$0xf]
        %v825 = vld [vmem:[%s2 + $0x168] sm:$0xf]
        %v826 = vld [vmem:[%s2 + $0x16c] sm:$0xf]
        %v827 = vld [vmem:[%s2 + $0x170] sm:$0xf]
        %v828 = vld [vmem:[%s2 + $0x174] sm:$0xf]
        %v829 = vld [vmem:[%s2 + $0x178] sm:$0xf]
        %v830 = vld [vmem:[%s2 + $0x17c] sm:$0xf]
        %v831 = vld [vmem:[%s2 + $0x180] sm:$0xf]
        %v832 = vld [vmem:[%s2 + $0x184] sm:$0xf]
        %v833 = vld [vmem:[%s2 + $0x188] sm:$0xf]
        %v834 = vld [vmem:[%s2 + $0x18c] sm:$0xf]
        %v835 = vld [vmem:[%s2 + $0x190] sm:$0xf]
        %v836 = vld [vmem:[%s2 + $0x194] sm:$0xf]
        %v837 = vld [vmem:[%s2 + $0x198] sm:$0xf]
        %v838 = vld [vmem:[%s2 + $0x19c] sm:$0xf]
        %v839 = vld [vmem:[%s2 + $0x1a0] sm:$0xf]
        %v840 = vld [vmem:[%s2 + $0x1a4] sm:$0xf]
        %v841 = vld [vmem:[%s2 + $0x1a8] sm:$0xf]
        %v842 = vld [vmem:[%s2 + $0x1ac] sm:$0xf]
        %v843 = vld [vmem:[%s2 + $0x1b0] sm:$0xf]
        %v844 = vld [vmem:[%s2 + $0x1b4] sm:$0xf]
        %v845 = vld [vmem:[%s2 + $0x1b8] sm:$0xf]
        %v846 = vld [vmem:[%s2 + $0x1bc] sm:$0xf]
        %v847 = vld [vmem:[%s2 + $0x1c0] sm:$0xf]
        %v848 = vld [vmem:[%s2 + $0x1c4] sm:$0xf]
        %v849 = vld [vmem:[%s2 + $0x1c8] sm:$0xf]
        %v850 = vld [vmem:[%s2 + $0x1cc] sm:$0xf]
        %v851 = vld [vmem:[%s2 + $0x1d0] sm:$0xf]
        %v852 = vld [vmem:[%s2 + $0x1d4] sm:$0xf]
        %v853 = vld [vmem:[%s2 + $0x1d8] sm:$0xf]
        %v854 = vld [vmem:[%s2 + $0x1dc] sm:$0xf]
        %v855 = vld [vmem:[%s2 + $0x1e0] sm:$0xf]
        %v856 = vld [vmem:[%s2 + $0x1e4] sm:$0xf]
        %v857 = vld [vmem:[%s2 + $0x1e8] sm:$0xf]
        %v858 = vld [vmem:[%s2 + $0x1ec] sm:$0xf]
        %v859 = vld [vmem:[%s2 + $0x1f0] sm:$0xf]
        %v860 = vld [vmem:[%s2 + $0x1f4] sm:$0xf]
        %v861 = vld [vmem:[%s2 + $0x1f8] sm:$0xf]
        %v862 = vld [vmem:[%s2 + $0x1fc] sm:$0xf]
        %v991 = vunpack.c.l.b16 %v735
        %v992 = vunpack.c.l.b16 %v736
        %v993 = vunpack.c.l.b16 %v737
        %v994 = vunpack.c.l.b16 %v738
        %v995 = vunpack.c.l.b16 %v739
        %v996 = vunpack.c.l.b16 %v740
        %v997 = vunpack.c.l.b16 %v741
        %v998 = vunpack.c.l.b16 %v742
        %v999 = vunpack.c.l.b16 %v743
        %v1000 = vunpack.c.l.b16 %v744
        %v1001 = vunpack.c.l.b16 %v745
        %v1002 = vunpack.c.l.b16 %v746
        %v1003 = vunpack.c.l.b16 %v747
        %v1004 = vunpack.c.l.b16 %v748
        %v1005 = vunpack.c.l.b16 %v749
        %v1006 = vunpack.c.l.b16 %v750
        %v1007 = vunpack.c.l.b16 %v751
        %v1008 = vunpack.c.l.b16 %v752
        %v1009 = vunpack.c.l.b16 %v753
        %v1010 = vunpack.c.l.b16 %v754
        %v1011 = vunpack.c.l.b16 %v755
        %v1012 = vunpack.c.l.b16 %v756
        %v1013 = vunpack.c.l.b16 %v757
        %v1014 = vunpack.c.l.b16 %v758
        %v1015 = vunpack.c.l.b16 %v759
        %v1016 = vunpack.c.l.b16 %v760
        %v1017 = vunpack.c.l.b16 %v761
        %v1018 = vunpack.c.l.b16 %v762
        %v1019 = vunpack.c.l.b16 %v763
        %v1020 = vunpack.c.l.b16 %v764
        %v1021 = vunpack.c.l.b16 %v765
        %v1022 = vunpack.c.l.b16 %v766
        %v1023 = vunpack.c.l.b16 %v767
        %v1024 = vunpack.c.l.b16 %v768
        %v1025 = vunpack.c.l.b16 %v769
        %v1026 = vunpack.c.l.b16 %v770
        %v1027 = vunpack.c.l.b16 %v771
        %v1028 = vunpack.c.l.b16 %v772
        %v1029 = vunpack.c.l.b16 %v773
        %v1030 = vunpack.c.l.b16 %v774
        %v1031 = vunpack.c.l.b16 %v775
        %v1032 = vunpack.c.l.b16 %v776
        %v1033 = vunpack.c.l.b16 %v777
        %v1034 = vunpack.c.l.b16 %v778
        %v1035 = vunpack.c.l.b16 %v779
        %v1036 = vunpack.c.l.b16 %v780
        %v1037 = vunpack.c.l.b16 %v781
        %v1038 = vunpack.c.l.b16 %v782
        %v1039 = vunpack.c.l.b16 %v783
        %v1040 = vunpack.c.l.b16 %v784
        %v1041 = vunpack.c.l.b16 %v785
        %v1042 = vunpack.c.l.b16 %v786
        %v1043 = vunpack.c.l.b16 %v787
        %v1044 = vunpack.c.l.b16 %v788
        %v1045 = vunpack.c.l.b16 %v789
        %v1046 = vunpack.c.l.b16 %v790
        %v1047 = vunpack.c.l.b16 %v791
        %v1048 = vunpack.c.l.b16 %v792
        %v1049 = vunpack.c.l.b16 %v793
        %v1050 = vunpack.c.l.b16 %v794
        %v1051 = vunpack.c.l.b16 %v795
        %v1052 = vunpack.c.l.b16 %v796
        %v1053 = vunpack.c.l.b16 %v797
        %v1054 = vunpack.c.l.b16 %v798
        %v1055 = vunpack.c.l.b16 %v799
        %v1056 = vunpack.c.l.b16 %v800
        %v1057 = vunpack.c.l.b16 %v801
        %v1058 = vunpack.c.l.b16 %v802
        %v1059 = vunpack.c.l.b16 %v803
        %v1060 = vunpack.c.l.b16 %v804
        %v1061 = vunpack.c.l.b16 %v805
        %v1062 = vunpack.c.l.b16 %v806
        %v1063 = vunpack.c.l.b16 %v807
        %v1064 = vunpack.c.l.b16 %v808
        %v1065 = vunpack.c.l.b16 %v809
        %v1066 = vunpack.c.l.b16 %v810
        %v1067 = vunpack.c.l.b16 %v811
        %v1068 = vunpack.c.l.b16 %v812
        %v1069 = vunpack.c.l.b16 %v813
        %v1070 = vunpack.c.l.b16 %v814
        %v1071 = vunpack.c.l.b16 %v815
        %v1072 = vunpack.c.l.b16 %v816
        %v1073 = vunpack.c.l.b16 %v817
        %v1074 = vunpack.c.l.b16 %v818
        %v1075 = vunpack.c.l.b16 %v819
        %v1076 = vunpack.c.l.b16 %v820
        %v1077 = vunpack.c.l.b16 %v821
        %v1078 = vunpack.c.l.b16 %v822
        %v1079 = vunpack.c.l.b16 %v823
        %v1080 = vunpack.c.l.b16 %v824
        %v1081 = vunpack.c.l.b16 %v825
        %v1082 = vunpack.c.l.b16 %v826
        %v1083 = vunpack.c.l.b16 %v827
        %v1084 = vunpack.c.l.b16 %v828
        %v1085 = vunpack.c.l.b16 %v829
        %v1086 = vunpack.c.l.b16 %v830
        %v1087 = vunpack.c.l.b16 %v831
        %v1088 = vunpack.c.l.b16 %v832
        %v1089 = vunpack.c.l.b16 %v833
        %v1090 = vunpack.c.l.b16 %v834
        %v1091 = vunpack.c.l.b16 %v835
        %v1092 = vunpack.c.l.b16 %v836
        %v1093 = vunpack.c.l.b16 %v837
        %v1094 = vunpack.c.l.b16 %v838
        %v1095 = vunpack.c.l.b16 %v839
        %v1096 = vunpack.c.l.b16 %v840
        %v1097 = vunpack.c.l.b16 %v841
        %v1098 = vunpack.c.l.b16 %v842
        %v1099 = vunpack.c.l.b16 %v843
        %v1100 = vunpack.c.l.b16 %v844
        %v1101 = vunpack.c.l.b16 %v845
        %v1102 = vunpack.c.l.b16 %v846
        %v1103 = vunpack.c.l.b16 %v847
        %v1104 = vunpack.c.l.b16 %v848
        %v1105 = vunpack.c.l.b16 %v849
        %v1106 = vunpack.c.l.b16 %v850
        %v1107 = vunpack.c.l.b16 %v851
        %v1108 = vunpack.c.l.b16 %v852
        %v1109 = vunpack.c.l.b16 %v853
        %v1110 = vunpack.c.l.b16 %v854
        %v1111 = vunpack.c.l.b16 %v855
        %v1112 = vunpack.c.l.b16 %v856
        %v1113 = vunpack.c.l.b16 %v857
        %v1114 = vunpack.c.l.b16 %v858
        %v1115 = vunpack.c.l.b16 %v859
        %v1116 = vunpack.c.l.b16 %v860
        %v1117 = vunpack.c.l.b16 %v861
        %v1118 = vunpack.c.l.b16 %v862
        %v1119 = vpack.c.b16 %v992, %v991
        %v1120 = vpack.c.b16 %v994, %v993
        %v1121 = vpack.c.b16 %v996, %v995
        %v1122 = vpack.c.b16 %v998, %v997
        %v1123 = vpack.c.b16 %v1000, %v999
        %v1124 = vpack.c.b16 %v1002, %v1001
        %v1125 = vpack.c.b16 %v1004, %v1003
        %v1126 = vpack.c.b16 %v1006, %v1005
        %v1127 = vpack.c.b16 %v1008, %v1007
        %v1128 = vpack.c.b16 %v1010, %v1009
        %v1129 = vpack.c.b16 %v1012, %v1011
        %v1130 = vpack.c.b16 %v1014, %v1013
        %v1131 = vpack.c.b16 %v1016, %v1015
        %v1132 = vpack.c.b16 %v1018, %v1017
        %v1133 = vpack.c.b16 %v1020, %v1019
        %v1134 = vpack.c.b16 %v1022, %v1021
        %v1135 = vpack.c.b16 %v1024, %v1023
        %v1136 = vpack.c.b16 %v1026, %v1025
        %v1137 = vpack.c.b16 %v1028, %v1027
        %v1138 = vpack.c.b16 %v1030, %v1029
        %v1139 = vpack.c.b16 %v1032, %v1031
        %v1140 = vpack.c.b16 %v1034, %v1033
        %v1141 = vpack.c.b16 %v1036, %v1035
        %v1142 = vpack.c.b16 %v1038, %v1037
        %v1143 = vpack.c.b16 %v1040, %v1039
        %v1144 = vpack.c.b16 %v1042, %v1041
        %v1145 = vpack.c.b16 %v1044, %v1043
        %v1146 = vpack.c.b16 %v1046, %v1045
        %v1147 = vpack.c.b16 %v1048, %v1047
        %v1148 = vpack.c.b16 %v1050, %v1049
        %v1149 = vpack.c.b16 %v1052, %v1051
        %v1150 = vpack.c.b16 %v1054, %v1053
        %v1151 = vpack.c.b16 %v1056, %v1055
        %v1152 = vpack.c.b16 %v1058, %v1057
        %v1153 = vpack.c.b16 %v1060, %v1059
        %v1154 = vpack.c.b16 %v1062, %v1061
        %v1155 = vpack.c.b16 %v1064, %v1063
        %v1156 = vpack.c.b16 %v1066, %v1065
        %v1157 = vpack.c.b16 %v1068, %v1067
        %v1158 = vpack.c.b16 %v1070, %v1069
        %v1159 = vpack.c.b16 %v1072, %v1071
        %v1160 = vpack.c.b16 %v1074, %v1073
        %v1161 = vpack.c.b16 %v1076, %v1075
        %v1162 = vpack.c.b16 %v1078, %v1077
        %v1163 = vpack.c.b16 %v1080, %v1079
        %v1164 = vpack.c.b16 %v1082, %v1081
        %v1165 = vpack.c.b16 %v1084, %v1083
        %v1166 = vpack.c.b16 %v1086, %v1085
        %v1167 = vpack.c.b16 %v1088, %v1087
        %v1168 = vpack.c.b16 %v1090, %v1089
        %v1169 = vpack.c.b16 %v1092, %v1091
        %v1170 = vpack.c.b16 %v1094, %v1093
        %v1171 = vpack.c.b16 %v1096, %v1095
        %v1172 = vpack.c.b16 %v1098, %v1097
        %v1173 = vpack.c.b16 %v1100, %v1099
        %v1174 = vpack.c.b16 %v1102, %v1101
        %v1175 = vpack.c.b16 %v1104, %v1103
        %v1176 = vpack.c.b16 %v1106, %v1105
        %v1177 = vpack.c.b16 %v1108, %v1107
        %v1178 = vpack.c.b16 %v1110, %v1109
        %v1179 = vpack.c.b16 %v1112, %v1111
        %v1180 = vpack.c.b16 %v1114, %v1113
        %v1181 = vpack.c.b16 %v1116, %v1115
        %v1182 = vpack.c.b16 %v1118, %v1117
        %1247 = vmatpush.bf16.msra.mxu0 %v1126
        %1248 = vmatpush.bf16.msra.mxu0 %v1125
        %1249 = vmatpush.bf16.msra.mxu0 %v1124
        %1250 = vmatpush.bf16.msra.mxu0 %v1123
        %1251 = vmatpush.bf16.msra.mxu0 %v1122
        %1252 = vmatpush.bf16.msra.mxu0 %v1121
        %1253 = vmatpush.bf16.msra.mxu0 %v1120
        %1254 = vmatpush.bf16.msra.mxu0 %v1119
        %1255 = vmatmul.bf16.gmra.mxu0 %v727
        %v1256 = vpop.f32.mrf.mxu0
        %v1257 = vadd.f32 0.0, %v1256
        %v1258 = vpop.f32.mrf.mxu0
        %1259 = vdwg.mxu0
        %1260 = vmatpush.bf16.msra.mxu0 %v1134
        %1261 = vmatpush.bf16.msra.mxu0 %v1133
        %1262 = vmatpush.bf16.msra.mxu0 %v1132
        %1263 = vmatpush.bf16.msra.mxu0 %v1131
        %1264 = vmatpush.bf16.msra.mxu0 %v1130
        %1265 = vmatpush.bf16.msra.mxu0 %v1129
        %1266 = vmatpush.bf16.msra.mxu0 %v1128
        %1267 = vmatpush.bf16.msra.mxu0 %v1127
        %1268 = vmatmul.bf16.gmra.mxu0 %v728
        %v1269 = vpop.f32.mrf.mxu0
        %v1270 = vadd.f32 %v1257, %v1269
        %v1271 = vpop.f32.mrf.mxu0
        %1272 = vdwg.mxu0
        %1273 = vmatpush.bf16.msra.mxu0 %v1142
        %1274 = vmatpush.bf16.msra.mxu0 %v1141
        %1275 = vmatpush.bf16.msra.mxu0 %v1140
        %1276 = vmatpush.bf16.msra.mxu0 %v1139
        %1277 = vmatpush.bf16.msra.mxu0 %v1138
        %1278 = vmatpush.bf16.msra.mxu0 %v1137
        %1279 = vmatpush.bf16.msra.mxu0 %v1136
        %1280 = vmatpush.bf16.msra.mxu0 %v1135
        %1281 = vmatmul.bf16.gmra.mxu0 %v729
        %v1282 = vpop.f32.mrf.mxu0
        %v1283 = vadd.f32 %v1270, %v1282
        %v1284 = vpop.f32.mrf.mxu0
        %1285 = vdwg.mxu0
        %1286 = vmatpush.bf16.msra.mxu0 %v1150
        %1287 = vmatpush.bf16.msra.mxu0 %v1149
        %1288 = vmatpush.bf16.msra.mxu0 %v1148
        %1289 = vmatpush.bf16.msra.mxu0 %v1147
        %1290 = vmatpush.bf16.msra.mxu0 %v1146
        %1291 = vmatpush.bf16.msra.mxu0 %v1145
        %1292 = vmatpush.bf16.msra.mxu0 %v1144
        %1293 = vmatpush.bf16.msra.mxu0 %v1143
        %1294 = vmatmul.bf16.gmra.mxu0 %v730
        %v1295 = vpop.f32.mrf.mxu0
        %v1296 = vadd.f32 %v1283, %v1295
        %v1297 = vpop.f32.mrf.mxu0
        %1298 = vdwg.mxu0
        %1299 = vmatpush.bf16.msra.mxu0 %v1158
        %1300 = vmatpush.bf16.msra.mxu0 %v1157
        %1301 = vmatpush.bf16.msra.mxu0 %v1156
        %1302 = vmatpush.bf16.msra.mxu0 %v1155
        %1303 = vmatpush.bf16.msra.mxu0 %v1154
        %1304 = vmatpush.bf16.msra.mxu0 %v1153
        %1305 = vmatpush.bf16.msra.mxu0 %v1152
        %1306 = vmatpush.bf16.msra.mxu0 %v1151
        %1307 = vmatmul.bf16.gmra.mxu0 %v731
        %v1308 = vpop.f32.mrf.mxu0
        %v1309 = vadd.f32 %v1296, %v1308
        %v1310 = vpop.f32.mrf.mxu0
        %1311 = vdwg.mxu0
        %1312 = vmatpush.bf16.msra.mxu0 %v1166
        %1313 = vmatpush.bf16.msra.mxu0 %v1165
        %1314 = vmatpush.bf16.msra.mxu0 %v1164
        %1315 = vmatpush.bf16.msra.mxu0 %v1163
        %1316 = vmatpush.bf16.msra.mxu0 %v1162
        %1317 = vmatpush.bf16.msra.mxu0 %v1161
        %1318 = vmatpush.bf16.msra.mxu0 %v1160
        %1319 = vmatpush.bf16.msra.mxu0 %v1159
        %1320 = vmatmul.bf16.gmra.mxu0 %v732
        %v1321 = vpop.f32.mrf.mxu0
        %v1322 = vadd.f32 %v1309, %v1321
        %v1323 = vpop.f32.mrf.mxu0
        %1324 = vdwg.mxu0
        %1325 = vmatpush.bf16.msra.mxu0 %v1174
        %1326 = vmatpush.bf16.msra.mxu0 %v1173
        %1327 = vmatpush.bf16.msra.mxu0 %v1172
        %1328 = vmatpush.bf16.msra.mxu0 %v1171
        %1329 = vmatpush.bf16.msra.mxu0 %v1170
        %1330 = vmatpush.bf16.msra.mxu0 %v1169
        %1331 = vmatpush.bf16.msra.mxu0 %v1168
        %1332 = vmatpush.bf16.msra.mxu0 %v1167
        %1333 = vmatmul.bf16.gmra.mxu0 %v733
        %v1334 = vpop.f32.mrf.mxu0
        %v1335 = vadd.f32 %v1322, %v1334
        %v1336 = vpop.f32.mrf.mxu0
        %1337 = vdwg.mxu0
        %1338 = vmatpush.bf16.msra.mxu0 %v1182
        %1339 = vmatpush.bf16.msra.mxu0 %v1181
        %1340 = vmatpush.bf16.msra.mxu0 %v1180
        %1341 = vmatpush.bf16.msra.mxu0 %v1179
        %1342 = vmatpush.bf16.msra.mxu0 %v1178
        %1343 = vmatpush.bf16.msra.mxu0 %v1177
        %1344 = vmatpush.bf16.msra.mxu0 %v1176
        %1345 = vmatpush.bf16.msra.mxu0 %v1175
        %1346 = vmatmul.bf16.gmra.mxu0 %v734
        %v1347 = vpop.f32.mrf.mxu0
        %v1348 = vadd.f32 %v1335, %v1347
        %v1349 = vpop.f32.mrf.mxu0
        %1350 = vdwg.mxu0
        %1351 = vrot.lane.b32.xlu0 %v1348, 32
        %v1352 = vpop.permute.xlu0 %1351
        %1354 = vrot.lane.b32.xlu0 %v209, 32
        %v1355 = vpop.permute.xlu0 %1354
        %v1357 = vsel %vm216, %v209, %v1355
        %v1358 = vsel %vm411, %v1357, 1.0
        %vm1359 = vcmask 785408
        %v1360 = vsel %vm1359, %v1358, 1.0
        %v1361 = vsub.f32 0.0, %v211
        %v1362 = vsel %vm216, %v1361, %v214
        %v1363 = vsel %vm411, %v1362, 0.0
        %v1364 = vsel %vm1359, %v1363, 0.0
        %v1365 = vmul.f32 %v1360, %v1348
        %v1366 = vmul.f32 %v1364, %v1352
        %v1367 = vadd.f32 %v1365, %v1366
        %1368 = vst [vmem:[%s207] sm:$0xff] %v1367
        %p1369 = scmp.lt.s32.totalorder %s14, 1
        %s1370 = scalar_select %p1369, %s14, 1
        %s1371 = smul.addr %s1370, 8
        %s1372 = scalar_lea.vmem %s3, %s1371
        // Predicated region
        $region71: #{aff_forward.1} parent=65 // pred_check
          %p1373 = pneg %p100
        $region72: #{aff_forward.1} parent=65 // pred_check_branch
          %1375 = sbr.rel (%p1373) target = $region74
        $region73: #{aff_forward.1} parent=65 // pred_region
          _
        $region74: #{aff_forward.1} parent=65 // pred_fallthru
          _
      $region66: #{aff_forward.1} parent=5 // pred_fallthru
        _
      %p1376 = scmp.le.s32.totalorder 2, %s9
      // Predicated region
      $region75: #{aff_forward.1} parent=5 // pred_check
        %p1377 = pneg %p1376
      $region76: #{aff_forward.1} parent=5 // pred_check_branch
        %1379 = sbr.rel (%p1377) target = $region78
      $region77: #{aff_forward.1} parent=5 // pred_region
        %s1380 = ssub.s32 %s9, 2
        // Predicated region
        $region79: #{aff_forward.1} parent=77 // pred_check
          %p1381 = pneg %p106
        $region80: #{aff_forward.1} parent=77 // pred_check_branch
          %1383 = sbr.rel (%p1381) target = $region82
        $region81: #{aff_forward.1} parent=77 // pred_region
          %p1384 = scmp.lt.s32.totalorder %s15, 1
          %s1385 = scalar_select %p1384, %s15, 1
          %s1386 = smul.addr %s1385, 8
          %s1387 = scalar_lea.vmem %s3, %s1386
        $region82: #{aff_forward.1} parent=77 // pred_fallthru
          _
      $region78: #{aff_forward.1} parent=5 // pred_fallthru
        _
    $region6: #{aff_forward.1} parent=1 // loop_footer
      %s13 = sadd.s32 1, %s9
    $region7: #{aff_forward.1} parent=1 // loop_footer_branch
      %8 = sbr.rel target = $region3
    $region8: #{aff_forward.1} parent=1 // loop_exit
      _

</llo_original>
